<compile_context>
chip_gen: v5e
topology: v5e:2x2
jax: 0.10.0
libtpu: 0.0.40
codegen_flags: <defaults>
</compile_context>

<pallas_src>
import functools

import jax
import jax.numpy as jnp
from jax import lax
from jax.experimental import pallas as pl
from jax.experimental.pallas import tpu as pltpu


# ----------------------------- kernels --------------------------------------


def _softmax_kernel(x_ref, o_ref, *, temperature: float):
    # training path: diff_fun(logits) = softmax(logits / T, axis=-1)
    x = x_ref[...].astype(jnp.float32) * (1.0 / temperature)
    m = jnp.max(x, axis=-1, keepdims=True)
    e = jnp.exp(x - m)
    s = jnp.sum(e, axis=-1, keepdims=True)
    # reciprocal on the EUP slot instead of a VALU divide.
    o_ref[...] = (e * pl.reciprocal(s, approx=True)).astype(o_ref.dtype)


def _hard_onehot_kernel(x_ref, o_ref):
    # eval path: fun(logits) = one_hot(argmax(logits, axis=-1)); first max wins.
    x = x_ref[...].astype(jnp.float32)
    n = x.shape[-1]
    col = lax.broadcasted_iota(jnp.int32, x.shape, dimension=x.ndim - 1)
    m = jnp.max(x, axis=-1, keepdims=True)
    is_max = x == m
    # smallest column index achieving the max (ties -> first)
    idx = jnp.min(jnp.where(is_max, col, jnp.int32(n)), axis=-1, keepdims=True)
    o_ref[...] = (col == idx).astype(o_ref.dtype)


# ----------------------------- wrapper ---------------------------------------

# Budget per (tm, N) block (compute is f32): 4 MiB. Double-buffered in + out
# => ~16 MiB resident, safely under the 32 MiB scoped limit on every chip.
_BLOCK_BYTES_BUDGET = 4 * 1024 * 1024
_VMEM_LIMIT_BYTES = 32 << 20


def _choose_row_tile(M: int, N: int, itemsize: int) -> int:
    # native packed sublane tile for the input dtype: f32 -> 8, bf16 -> 16, i8 -> 32
    sub = 8 * max(1, 4 // max(1, itemsize))

    def round_up(v, mult):
        return ((v + mult - 1) // mult) * mult

    # rows that fit the per-block byte budget (f32 compute width)
    tm = max(sub, (_BLOCK_BYTES_BUDGET // (N * 4)) // sub * sub)
    # keep >= 2 grid steps when the problem allows it (megacore on v7x)
    if M > sub:
        tm = min(tm, round_up(pl.cdiv(M, 2), sub))
    # never larger than the (sublane-rounded) row count
    tm = min(tm, round_up(M, sub))
    return max(tm, sub)


def differentiable_select_k(logits: jax.Array,
                            *,
                            training: bool,
                            temperature: float = 1.0) -> jax.Array:
    """Pallas implementation of DifferentiableSelectKModel.forward.

    logits: (B, K, N) float array.  Returns same shape/dtype.
    """
    B, K, N = logits.shape
    M = B * K
    x2d = logits.reshape(M, N)

    tm = _choose_row_tile(M, N, jnp.dtype(logits.dtype).itemsize)
    grid = (pl.cdiv(M, tm),)
    # TODO(synk): for very large N (block no longer fits VMEM) switch to an
    # online-softmax with a reduction grid axis instead of block_shape=(tm, N).

    if training:
        kernel = functools.partial(_softmax_kernel, temperature=temperature)
    else:
        kernel = _hard_onehot_kernel

    out2d = pl.pallas_call(
        kernel,
        out_shape=jax.ShapeDtypeStruct((M, N), logits.dtype),
        grid_spec=pltpu.PrefetchScalarGridSpec(
            num_scalar_prefetch=0,
            grid=grid,
            # Ragged last block is padded by Pallas; rows are independent and
            # out-of-bounds rows are discarded on writeback, so no jnp.pad/slice.
            in_specs=[pl.BlockSpec((tm, N), lambda i: (i, 0))],
            out_specs=pl.BlockSpec((tm, N), lambda i: (i, 0)),
        ),
        compiler_params=pltpu.CompilerParams(
            dimension_semantics=("parallel",),
            vmem_limit_bytes=_VMEM_LIMIT_BYTES),
    )(x2d)

    return out2d.reshape(B, K, N)


# ----------------------------- demo / check ----------------------------------

if __name__ == "__main__":
    key = jax.random.PRNGKey(0)
    B, K, N = 2, 4, 128  # batch=2, select k=4 rows of logits over N=128 candidates
    logits = jax.random.normal(key, (B, K, N), dtype=jnp.float32)

    # training=True branch: diff_fun (softmax relaxation)
    soft = differentiable_select_k(logits, training=True, temperature=0.5)
    soft = jax.block_until_ready(soft)

    # training=False branch: fun (hard one-hot argmax)
    hard = differentiable_select_k(logits, training=False)
    hard = jax.block_until_ready(hard)

    # lightweight self-check against plain-JAX references
    # (approx reciprocal -> allow ~1e-3-level deviation in the softmax path)
    ref_soft = jax.nn.softmax(logits / 0.5, axis=-1)
    ref_hard = jax.nn.one_hot(jnp.argmax(logits, axis=-1), N, dtype=logits.dtype)
    assert jnp.allclose(soft, ref_soft, atol=5e-3, rtol=5e-3)
    assert jnp.allclose(jnp.sum(soft, axis=-1), 1.0, atol=5e-3)
    assert jnp.array_equal(hard, ref_hard)
    assert soft.shape == logits.shape and hard.shape == logits.shape

    print("KERNEL_OK")
</pallas_src>

<mosaic_0001>
module attributes {stable_mosaic.version = 11 : i64} {
  func.func @_softmax_kernel(%arg0: i32, %arg1: memref<8x128xf32, #tpu.memory_space<vmem>>, %arg2: memref<8x128xf32, #tpu.memory_space<vmem>>) attributes {dimension_semantics = [#tpu.dimension_semantics<parallel>], iteration_bounds = array<i64: 1>, scalar_prefetch = 0 : i64, scratch_operands = 0 : i64, tpu.core_type = #tpu.core_type<tc>, window_params = [{transform_indices = @transform_0, window_bounds = array<i64: 8, 128>}, {transform_indices = @transform_1, window_bounds = array<i64: 8, 128>}]} {
    %c0 = arith.constant 0 : index
    %c0_0 = arith.constant 0 : index
    %0 = vector.load %arg1[%c0, %c0_0] : memref<8x128xf32, #tpu.memory_space<vmem>>, vector<8x128xf32>
    %cst = arith.constant 2.000000e+00 : f32
    %1 = vector.broadcast %cst : f32 to vector<8x128xf32>
    %2 = arith.mulf %0, %1 : vector<8x128xf32>
    %cst_1 = arith.constant dense<0xFF800000> : vector<8xf32>
    %3 = vector.multi_reduction <maximumf>, %2, %cst_1 [1] : vector<8x128xf32> to vector<8xf32>
    %4 = vector.shape_cast %3 : vector<8xf32> to vector<8x1xf32>
    %5 = vector.broadcast %4 : vector<8x1xf32> to vector<8x128xf32>
    %6 = arith.subf %2, %5 : vector<8x128xf32>
    %7 = math.exp %6 : vector<8x128xf32>
    %cst_2 = arith.constant dense<0.000000e+00> : vector<8xf32>
    %8 = vector.multi_reduction <add>, %7, %cst_2 [1] : vector<8x128xf32> to vector<8xf32>
    %9 = vector.shape_cast %8 : vector<8xf32> to vector<8x1xf32>
    %10 = tpu.reciprocal %9 {approx = true} : vector<8x1xf32> -> vector<8x1xf32>
    %11 = vector.broadcast %10 : vector<8x1xf32> to vector<8x128xf32>
    %12 = arith.mulf %7, %11 : vector<8x128xf32>
    %c0_3 = arith.constant 0 : index
    %c0_4 = arith.constant 0 : index
    %13 = vector.load %arg2[%c0_3, %c0_4] : memref<8x128xf32, #tpu.memory_space<vmem>>, vector<8x128xf32>
    tpu.vector_store %arg2[%c0_3, %c0_4], %12 {strides = array<i32>} : memref<8x128xf32, #tpu.memory_space<vmem>>, vector<8x128xf32>,
    return
  }
  func.func @transform_0(%arg0: i32) -> (i32, i32) {
    %c0_i32 = arith.constant 0 : i32
    %c0_i32_0 = arith.constant 0 : i32
    return %arg0, %c0_i32 : i32, i32
  }
  func.func @transform_1(%arg0: i32) -> (i32, i32) {
    %c0_i32 = arith.constant 0 : i32
    %c0_i32_0 = arith.constant 0 : i32
    return %arg0, %c0_i32 : i32, i32
  }
}

</mosaic_0001>

<llo_original>
// kernel: tpu_custom_call.1
$region0: #{tpu_custom_call.1}
  #allocation0 [shape = 'u32[]', space=smem, size = 0x4, offset = 0x4, fixed_abs, tag = 'smem constant byte address 0x4 - core index']
  #allocation1 [shape = 'u32[72,128]{1,0:T(1,128)}', space=vmem, size = 0x9000, scoped, tag = 'internal scratch']
  %s0 = inlined_call_operand.hbm [shape: f32[8,128], index: 0, kind: input, shape index: {}]
  %s1 = inlined_call_operand.hbm [shape: f32[8,128], index: 1, kind: output, shape index: {}]
  %s2 = sld [smem:[#allocation0]]
  $region18: #{tpu_custom_call.1} parent=0
    _
  %s4 = ssub.s32 1, %s2
  %s5 = scalar_select 0, %s4, %s2
  $region1: #{tpu_custom_call.1} parent=0
    #allocation2 [shape = 'u8[4096]{0}', space=vmem, size = 0x1000, scoped, tag = 'input window, operand 0, single buffered']
    #allocation3 [shape = 's32[1]{0}', space=sflag, size = 0x4, scoped, tag = 'scoped memory for tpu_custom_call.1']
    #allocation4 [shape = 's32[1]{0}', space=sflag, size = 0x4, scoped, tag = 'scoped memory for tpu_custom_call.1']
    #allocation5 [shape = 'u8[4096]{0}', space=vmem, size = 0x1000, scoped, tag = 'output window, operand 0, single buffered']
    %6 = vsyncpa [#allocation3], 0
    %7 = vsyncpa [#allocation4], 0
    // Predicated region
    $region2: #{tpu_custom_call.1} parent=1 // pred_check
      _
    $region3: #{tpu_custom_call.1} parent=1 // pred_check_branch
      %9 = sbr.rel (0) target = $region5
    $region4: #{tpu_custom_call.1} parent=1 // pred_region
      %11 = vsyncadd [#allocation3], 0
      %s13 = sshll.u32 %s0, 4
      %s14 = int_to_ptr.hbm [resolvable:$true] %s13
      %s15 = sshll.u32 [#allocation2], 4
      %s16 = int_to_ptr.vmem [resolvable:$true] %s15
      %18 = dma.hbm_to_vmem [thread:$0]  %s14, 128, %s16, [#allocation3]
    $region5: #{tpu_custom_call.1} parent=1 // pred_fallthru
      _
    // Predicated region
    $region6: #{tpu_custom_call.1} parent=1 // pred_check
      _
    $region7: #{tpu_custom_call.1} parent=1 // pred_check_branch
      %20 = sbr.rel (0) target = $region9
    $region8: #{tpu_custom_call.1} parent=1 // pred_region
      %22 = dma.done [#allocation3], 128
    $region9: #{tpu_custom_call.1} parent=1 // pred_fallthru
      _
    %v23 = vld [vmem:[#allocation2] sm:$0xff]
    %v24 = vmul.f32 %v23, 2.0
    %25 = vmax.xlane.f32.xlu0 %v24
    %v26 = vpop.xlane.xlu0 %25
    %v27 = vsub.f32 %v24, %v26
    %v28 = vmul.f32 %v27, 1.442695
    %v29 = vpow.pop %v28
    %30 = vadd.xlane.f32.xlu0 %v29
    %v31 = vpop.xlane.xlu0 %30
    %v32 = vrcp.pop %v31
    %v33 = vmul.f32 %v29, %v32
    %34 = vst [vmem:[#allocation5] sm:$0xff] %v33
    // Predicated region
    $region10: #{tpu_custom_call.1} parent=1 // pred_check
      _
    $region11: #{tpu_custom_call.1} parent=1 // pred_check_branch
      %36 = sbr.rel (0) target = $region13
    $region12: #{tpu_custom_call.1} parent=1 // pred_region
      %38 = vsyncadd [#allocation4], 0
      %s40 = sshll.u32 [#allocation5], 4
      %s41 = int_to_ptr.vmem [resolvable:$true] %s40
      %s42 = sshll.u32 %s1, 4
      %s43 = int_to_ptr.hbm [resolvable:$true] %s42
      %45 = dma.vmem_to_hbm [thread:$0]  %s41, 128, %s43, [#allocation4]
    $region13: #{tpu_custom_call.1} parent=1 // pred_fallthru
      _
    // Predicated region
    $region14: #{tpu_custom_call.1} parent=1 // pred_check
      _
    $region15: #{tpu_custom_call.1} parent=1 // pred_check_branch
      %47 = sbr.rel (0) target = $region17
    $region16: #{tpu_custom_call.1} parent=1 // pred_region
      %49 = dma.done [#allocation4], 128
    $region17: #{tpu_custom_call.1} parent=1 // pred_fallthru
      _
    %50 = vsyncpa [#allocation3], 1
    %51 = vsyncpa [#allocation4], 1

</llo_original>
